<compile_context>
chip_gen: v6e
topology: v6e:2x2x1
jax: 0.10.0
libtpu: 0.0.40
codegen_flags: <defaults>
</compile_context>

<pallas_src>
import functools
import math

import jax
import jax.numpy as jnp
from jax.experimental import pallas as pl
from jax.experimental.pallas import tpu as pltpu


# --------------------------- Fused kernel (one batch element per step) ------
def _attention_head_kernel(x_ref, wq_ref, bq_ref, wk_ref, bk_ref,
                           wv_ref, bv_ref, o_ref, *, head_dim):
    x = x_ref[...]                                          # (S, E), bf16

    # q/k/v projections: bf16 MXU matmuls, f32 accumulation, f32 bias add.
    q = jnp.dot(x, wq_ref[...], preferred_element_type=jnp.float32) + bq_ref[...]
    k = jnp.dot(x, wk_ref[...], preferred_element_type=jnp.float32) + bk_ref[...]
    v = jnp.dot(x, wv_ref[...], preferred_element_type=jnp.float32) + bv_ref[...]

    # scores = (q @ k^T) // sqrt(dim_k): contract the last dim of both
    # operands so no explicit transpose of k is materialized.
    raw = jax.lax.dot_general(
        q, k, (((1,), (1,)), ((), ())), preferred_element_type=jnp.float32)
    scores = jnp.floor(raw / jnp.float32(math.sqrt(head_dim)))

    # Numerically-stable softmax in f32.  Exact reciprocal keeps the result
    # within the test tolerance; approx=True (EUP slot) is available if a
    # looser accuracy budget is acceptable.
    scores = scores - jnp.max(scores, axis=-1, keepdims=True)
    e = jnp.exp(scores)
    weights = e * pl.reciprocal(jnp.sum(e, axis=-1, keepdims=True), approx=False)

    o_ref[...] = jnp.dot(
        weights, v, preferred_element_type=jnp.float32).astype(o_ref.dtype)


# --------------------------- Wrapper -----------------------------------------
def attention_head(hidden_state, wq, bq, wk, bk, wv, bv,
                   *, compute_dtype=jnp.bfloat16):
    """hidden_state: (B, S, E); wq/wk/wv: (E, H); bq/bk/bv: (H,). Returns f32."""
    B, S, E = hidden_state.shape
    H = wq.shape[1]

    # bf16 MXU feeds (halves DMA bytes for x and the weights).  In a real
    # model the weight casts / bias reshapes would be hoisted to param init.
    x = hidden_state.astype(compute_dtype)
    wq_c = wq.astype(compute_dtype)
    wk_c = wk.astype(compute_dtype)
    wv_c = wv.astype(compute_dtype)
    bq_r = bq.astype(jnp.float32).reshape(1, H)
    bk_r = bk.astype(jnp.float32).reshape(1, H)
    bv_r = bv.astype(jnp.float32).reshape(1, H)

    itemsize = jnp.dtype(compute_dtype).itemsize
    cost = pl.CostEstimate(
        flops=2 * B * S * E * (3 * H) + 2 * 2 * B * S * S * H,
        transcendentals=B * S * S,                      # exp in the softmax
        bytes_accessed=(B * S * E * itemsize            # x
                        + 3 * E * H * itemsize          # weights
                        + 3 * H * 4                     # biases
                        + B * S * H * 4),               # output
    )

    w_spec = pl.BlockSpec((E, H), lambda b: (0, 0))     # resident across steps
    b_spec = pl.BlockSpec((1, H), lambda b: (0, 0))

    out = pl.pallas_call(
        functools.partial(_attention_head_kernel, head_dim=H),
        out_shape=jax.ShapeDtypeStruct((B, S, H), jnp.float32),
        grid_spec=pltpu.PrefetchScalarGridSpec(
            num_scalar_prefetch=0,
            grid=(B,),
            in_specs=[
                pl.BlockSpec((None, S, E), lambda b: (b, 0, 0)),  # x (batch-squeezed)
                w_spec, b_spec,                                    # q proj
                w_spec, b_spec,                                    # k proj
                w_spec, b_spec,                                    # v proj
            ],
            out_specs=pl.BlockSpec((None, S, H), lambda b: (b, 0, 0)),
        ),
        compiler_params=pltpu.CompilerParams(
            dimension_semantics=("parallel",)),          # megacore split on v7x
        cost_estimate=cost,
    )(x, wq_c, bq_r, wk_c, bk_r, wv_c, bv_r)
    return out


# --------------------------- Pure-JAX reference ------------------------------
def _reference(x, wq, bq, wk, bk, wv, bv):
    """Reference on the same (possibly bf16-rounded) operands, f32 math."""
    xf = x.astype(jnp.float32)
    q = xf @ wq.astype(jnp.float32) + bq.astype(jnp.float32)
    k = xf @ wk.astype(jnp.float32) + bk.astype(jnp.float32)
    v = xf @ wv.astype(jnp.float32) + bv.astype(jnp.float32)
    dim_k = k.shape[-1]
    scores = jnp.floor(jnp.einsum("bsh,bth->bst", q, k)
                       / jnp.float32(math.sqrt(dim_k)))
    weights = jax.nn.softmax(scores, axis=-1)
    return jnp.einsum("bst,bth->bsh", weights, v)


if __name__ == "__main__":
    # Small shapes consistent with the module: embed_dim=32, head_dim=16.
    B, S, E, H = 2, 8, 32, 16

    key = jax.random.PRNGKey(0)
    kx, kq, kbq, kk, kbk, kv, kbv = jax.random.split(key, 7)

    # PyTorch-Linear-style uniform(-1/sqrt(E), 1/sqrt(E)) init.
    bound = 1.0 / math.sqrt(E)
    wq = jax.random.uniform(kq, (E, H), jnp.float32, -bound, bound)
    bq = jax.random.uniform(kbq, (H,), jnp.float32, -bound, bound)
    wk = jax.random.uniform(kk, (E, H), jnp.float32, -bound, bound)
    bk = jax.random.uniform(kbk, (H,), jnp.float32, -bound, bound)
    wv = jax.random.uniform(kv, (E, H), jnp.float32, -bound, bound)
    bv = jax.random.uniform(kbv, (H,), jnp.float32, -bound, bound)

    x = jax.random.normal(kx, (B, S, E), jnp.float32)

    out = attention_head(x, wq, bq, wk, bk, wv, bv)
    out = jax.block_until_ready(out)

    # Compare against a reference computed from the *same* bf16-rounded
    # operands the kernel consumes (the bf16 cast is a performance choice;
    # the module semantics -- floor-div scaling, softmax, PV -- are identical
    # and all accumulation is f32 in both paths).
    ref = _reference(x.astype(jnp.bfloat16),
                     wq.astype(jnp.bfloat16), bq,
                     wk.astype(jnp.bfloat16), bk,
                     wv.astype(jnp.bfloat16), bv)

    assert out.shape == (B, S, H)
    assert jnp.allclose(out, ref, atol=1e-4, rtol=1e-4), (
        float(jnp.max(jnp.abs(out - ref))))

    print("KERNEL_OK")
</pallas_src>

<mosaic_0001>
module attributes {stable_mosaic.version = 11 : i64} {
  func.func @_attention_head_kernel(%arg0: i32, %arg1: memref<1x8x32xbf16, #tpu.memory_space<vmem>>, %arg2: memref<32x16xbf16, #tpu.memory_space<vmem>>, %arg3: memref<1x16xf32, #tpu.memory_space<vmem>>, %arg4: memref<32x16xbf16, #tpu.memory_space<vmem>>, %arg5: memref<1x16xf32, #tpu.memory_space<vmem>>, %arg6: memref<32x16xbf16, #tpu.memory_space<vmem>>, %arg7: memref<1x16xf32, #tpu.memory_space<vmem>>, %arg8: memref<1x8x16xf32, #tpu.memory_space<vmem>>) attributes {dimension_semantics = [#tpu.dimension_semantics<parallel>], iteration_bounds = array<i64: 2>, scalar_prefetch = 0 : i64, scratch_operands = 0 : i64, tpu.core_type = #tpu.core_type<tc>, window_params = [{transform_indices = @transform_0, window_bounds = array<i64: 1, 8, 32>}, {pipeline_mode = #tpu.pipeline_mode<synchronous>, transform_indices = @transform_1, window_bounds = array<i64: 32, 16>}, {pipeline_mode = #tpu.pipeline_mode<synchronous>, transform_indices = @transform_2, window_bounds = array<i64: 1, 16>}, {pipeline_mode = #tpu.pipeline_mode<synchronous>, transform_indices = @transform_3, window_bounds = array<i64: 32, 16>}, {pipeline_mode = #tpu.pipeline_mode<synchronous>, transform_indices = @transform_4, window_bounds = array<i64: 1, 16>}, {pipeline_mode = #tpu.pipeline_mode<synchronous>, transform_indices = @transform_5, window_bounds = array<i64: 32, 16>}, {pipeline_mode = #tpu.pipeline_mode<synchronous>, transform_indices = @transform_6, window_bounds = array<i64: 1, 16>}, {transform_indices = @transform_7, window_bounds = array<i64: 1, 8, 16>}]} {
    %c0 = arith.constant 0 : index
    %c0_0 = arith.constant 0 : index
    %c0_1 = arith.constant 0 : index
    %0 = vector.load %arg1[%c0, %c0_0, %c0_1] : memref<1x8x32xbf16, #tpu.memory_space<vmem>>, vector<1x8x32xbf16>
    %1 = vector.shape_cast %0 : vector<1x8x32xbf16> to vector<8x32xbf16>
    %c0_2 = arith.constant 0 : index
    %c0_3 = arith.constant 0 : index
    %2 = vector.load %arg2[%c0_2, %c0_3] : memref<32x16xbf16, #tpu.memory_space<vmem>>, vector<32x16xbf16>
    %cst = arith.constant dense<0.000000e+00> : vector<8x16xf32>
    %3 = tpu.matmul %1, %2, %cst {dimension_numbers = #tpu.dot_dimension_numbers<[1], [0], [0], [1], [0, 0, 1, 1], [], []>} : vector<8x32xbf16>, vector<32x16xbf16>, vector<8x16xf32> -> vector<8x16xf32>
    %c0_4 = arith.constant 0 : index
    %c0_5 = arith.constant 0 : index
    %4 = vector.load %arg3[%c0_4, %c0_5] : memref<1x16xf32, #tpu.memory_space<vmem>>, vector<1x16xf32>
    %5 = vector.broadcast %4 : vector<1x16xf32> to vector<8x16xf32>
    %6 = arith.addf %3, %5 : vector<8x16xf32>
    %c0_6 = arith.constant 0 : index
    %c0_7 = arith.constant 0 : index
    %7 = vector.load %arg4[%c0_6, %c0_7] : memref<32x16xbf16, #tpu.memory_space<vmem>>, vector<32x16xbf16>
    %cst_8 = arith.constant dense<0.000000e+00> : vector<8x16xf32>
    %8 = tpu.matmul %1, %7, %cst_8 {dimension_numbers = #tpu.dot_dimension_numbers<[1], [0], [0], [1], [0, 0, 1, 1], [], []>} : vector<8x32xbf16>, vector<32x16xbf16>, vector<8x16xf32> -> vector<8x16xf32>
    %c0_9 = arith.constant 0 : index
    %c0_10 = arith.constant 0 : index
    %9 = vector.load %arg5[%c0_9, %c0_10] : memref<1x16xf32, #tpu.memory_space<vmem>>, vector<1x16xf32>
    %10 = vector.broadcast %9 : vector<1x16xf32> to vector<8x16xf32>
    %11 = arith.addf %8, %10 : vector<8x16xf32>
    %c0_11 = arith.constant 0 : index
    %c0_12 = arith.constant 0 : index
    %12 = vector.load %arg6[%c0_11, %c0_12] : memref<32x16xbf16, #tpu.memory_space<vmem>>, vector<32x16xbf16>
    %cst_13 = arith.constant dense<0.000000e+00> : vector<8x16xf32>
    %13 = tpu.matmul %1, %12, %cst_13 {dimension_numbers = #tpu.dot_dimension_numbers<[1], [0], [0], [1], [0, 0, 1, 1], [], []>} : vector<8x32xbf16>, vector<32x16xbf16>, vector<8x16xf32> -> vector<8x16xf32>
    %c0_14 = arith.constant 0 : index
    %c0_15 = arith.constant 0 : index
    %14 = vector.load %arg7[%c0_14, %c0_15] : memref<1x16xf32, #tpu.memory_space<vmem>>, vector<1x16xf32>
    %15 = vector.broadcast %14 : vector<1x16xf32> to vector<8x16xf32>
    %16 = arith.addf %13, %15 : vector<8x16xf32>
    %cst_16 = arith.constant dense<0.000000e+00> : vector<8x8xf32>
    %17 = tpu.matmul %6, %11, %cst_16 {dimension_numbers = #tpu.dot_dimension_numbers<[1], [1], [0], [0], [0, 0, 1, 0], [], []>} : vector<8x16xf32>, vector<8x16xf32>, vector<8x8xf32> -> vector<8x8xf32>
    %cst_17 = arith.constant 4.000000e+00 : f32
    %18 = vector.broadcast %cst_17 : f32 to vector<8x8xf32>
    %19 = arith.divf %17, %18 : vector<8x8xf32>
    %20 = math.floor %19 : vector<8x8xf32>
    %cst_18 = arith.constant dense<0xFF800000> : vector<8xf32>
    %21 = vector.multi_reduction <maximumf>, %20, %cst_18 [1] : vector<8x8xf32> to vector<8xf32>
    %22 = vector.shape_cast %21 : vector<8xf32> to vector<8x1xf32>
    %23 = vector.broadcast %22 : vector<8x1xf32> to vector<8x8xf32>
    %24 = arith.subf %20, %23 : vector<8x8xf32>
    %25 = math.exp %24 : vector<8x8xf32>
    %cst_19 = arith.constant dense<0.000000e+00> : vector<8xf32>
    %26 = vector.multi_reduction <add>, %25, %cst_19 [1] : vector<8x8xf32> to vector<8xf32>
    %27 = vector.shape_cast %26 : vector<8xf32> to vector<8x1xf32>
    %28 = tpu.reciprocal %27 : vector<8x1xf32> -> vector<8x1xf32>
    %29 = vector.broadcast %28 : vector<8x1xf32> to vector<8x8xf32>
    %30 = arith.mulf %25, %29 : vector<8x8xf32>
    %cst_20 = arith.constant dense<0.000000e+00> : vector<8x16xf32>
    %31 = tpu.matmul %30, %16, %cst_20 {dimension_numbers = #tpu.dot_dimension_numbers<[1], [0], [0], [1], [0, 0, 1, 1], [], []>} : vector<8x8xf32>, vector<8x16xf32>, vector<8x16xf32> -> vector<8x16xf32>
    %c0_21 = arith.constant 0 : index
    %c0_22 = arith.constant 0 : index
    %c0_23 = arith.constant 0 : index
    %32 = vector.load %arg8[%c0_21, %c0_22, %c0_23] : memref<1x8x16xf32, #tpu.memory_space<vmem>>, vector<1x8x16xf32>
    %33 = vector.shape_cast %32 : vector<1x8x16xf32> to vector<8x16xf32>
    %34 = vector.shape_cast %31 : vector<8x16xf32> to vector<1x8x16xf32>
    tpu.vector_store %arg8[%c0_21, %c0_22, %c0_23], %34 {strides = array<i32>} : memref<1x8x16xf32, #tpu.memory_space<vmem>>, vector<1x8x16xf32>,
    return
  }
  func.func @transform_0(%arg0: i32) -> (i32, i32, i32) {
    %c0_i32 = arith.constant 0 : i32
    %c0_i32_0 = arith.constant 0 : i32
    %c0_i32_1 = arith.constant 0 : i32
    return %arg0, %c0_i32, %c0_i32_0 : i32, i32, i32
  }
  func.func @transform_1(%arg0: i32) -> (i32, i32) {
    %c0_i32 = arith.constant 0 : i32
    %c0_i32_0 = arith.constant 0 : i32
    %c0_i32_1 = arith.constant 0 : i32
    return %c0_i32, %c0_i32_0 : i32, i32
  }
  func.func @transform_2(%arg0: i32) -> (i32, i32) {
    %c0_i32 = arith.constant 0 : i32
    %c0_i32_0 = arith.constant 0 : i32
    %c0_i32_1 = arith.constant 0 : i32
    return %c0_i32, %c0_i32_0 : i32, i32
  }
  func.func @transform_3(%arg0: i32) -> (i32, i32) {
    %c0_i32 = arith.constant 0 : i32
    %c0_i32_0 = arith.constant 0 : i32
    %c0_i32_1 = arith.constant 0 : i32
    return %c0_i32, %c0_i32_0 : i32, i32
  }
  func.func @transform_4(%arg0: i32) -> (i32, i32) {
    %c0_i32 = arith.constant 0 : i32
    %c0_i32_0 = arith.constant 0 : i32
    %c0_i32_1 = arith.constant 0 : i32
    return %c0_i32, %c0_i32_0 : i32, i32
  }
  func.func @transform_5(%arg0: i32) -> (i32, i32) {
    %c0_i32 = arith.constant 0 : i32
    %c0_i32_0 = arith.constant 0 : i32
    %c0_i32_1 = arith.constant 0 : i32
    return %c0_i32, %c0_i32_0 : i32, i32
  }
  func.func @transform_6(%arg0: i32) -> (i32, i32) {
    %c0_i32 = arith.constant 0 : i32
    %c0_i32_0 = arith.constant 0 : i32
    %c0_i32_1 = arith.constant 0 : i32
    return %c0_i32, %c0_i32_0 : i32, i32
  }
  func.func @transform_7(%arg0: i32) -> (i32, i32, i32) {
    %c0_i32 = arith.constant 0 : i32
    %c0_i32_0 = arith.constant 0 : i32
    %c0_i32_1 = arith.constant 0 : i32
    return %arg0, %c0_i32, %c0_i32_0 : i32, i32, i32
  }
}

</mosaic_0001>

<llo_original>
// kernel: tpu_custom_call.1
$region0: #{tpu_custom_call.1}
  #allocation0 [shape = 'u32[]', space=smem, size = 0x4, offset = 0x4, fixed_abs, tag = 'smem constant byte address 0x4 - core index']
  #allocation1 [shape = 'u32[144,128]{1,0:T(1,128)}', space=vmem, size = 0x12000, scoped, tag = 'internal scratch']
  %s0 = inlined_call_operand.vmem [shape: bf16[2,8,32], index: 0, kind: input, shape index: {}]
  %s1 = inlined_call_operand.vmem [shape: bf16[32,16], index: 1, kind: input, shape index: {}]
  %s2 = inlined_call_operand.vmem [shape: f32[1,16], index: 2, kind: input, shape index: {}]
  %s3 = inlined_call_operand.vmem [shape: bf16[32,16], index: 3, kind: input, shape index: {}]
  %s4 = inlined_call_operand.vmem [shape: f32[1,16], index: 4, kind: input, shape index: {}]
  %s5 = inlined_call_operand.vmem [shape: bf16[32,16], index: 5, kind: input, shape index: {}]
  %s6 = inlined_call_operand.vmem [shape: f32[1,16], index: 6, kind: input, shape index: {}]
  %s7 = inlined_call_operand.hbm [shape: f32[2,8,16], index: 7, kind: output, shape index: {}]
  %s8 = sld [smem:[#allocation0]]
  $region61: #{tpu_custom_call.1} parent=0
    _
  %s10 = ssub.s32 1, %s8
  %s11 = scalar_select 0, %s10, %s8
  $region1: #{tpu_custom_call.1} parent=0
    #allocation2 [shape = 'u8[8192]{0}', space=vmem, size = 0x2000, scoped, tag = 'output window, operand 0']
    #allocation3 [shape = 's32[2]{0}', space=sflag, size = 0x8, scoped, tag = 'scoped memory for tpu_custom_call.1']
    %12 = vsyncpa [#allocation3], 0
    %s13 = scalar_lea.sflag [#allocation3], 1
    %14 = vsyncpa %s13, 0
    loop: start=0, step=1, limit=4
    $region2: #{tpu_custom_call.1} parent=1 // loop_pre_header
      _
    $region3: #{tpu_custom_call.1} parent=1 // loop_header
      %s16 = sphi 0, %s20
      %p17 = scmp.ge.s32.totalorder %s16, 4
      %s26 = sphi 0, %s28
      %s29 = sphi 0, %s26
      %s30 = sphi 0, %s29
      %s46 = sphi 0, %s30
      %s50 = sphi 0, %s50
      %s52 = sphi 0, %s50
      %s53 = sphi 0, %s52
      %s67 = sphi 0, %s53
      %s71 = sphi 0, %s71
      %s73 = sphi 0, %s71
      %s74 = sphi 0, %s73
      %s88 = sphi 0, %s74
      %s92 = sphi 0, %s92
      %s94 = sphi 0, %s92
      %s95 = sphi 0, %s94
      %s109 = sphi 0, %s95
      %s113 = sphi 0, %s113
      %s115 = sphi 0, %s113
      %s116 = sphi 0, %s115
      %s130 = sphi 0, %s116
      %s134 = sphi 0, %s134
      %s136 = sphi 0, %s134
      %s137 = sphi 0, %s136
      %s151 = sphi 0, %s137
      %s155 = sphi 0, %s155
      %s157 = sphi 0, %s155
      %s158 = sphi 0, %s157
      %s172 = sphi 0, %s158
      %s178 = sphi 0, %s180
      %s181 = sphi 0, %s178
      %s182 = sphi 0, %s181
      %s198 = sphi 0, %s182
    $region4: #{tpu_custom_call.1} parent=1 // loop_header_branch
      %19 = sbr.rel (%p17) target = $region8
    $region5: #{tpu_custom_call.1} parent=1 // loop_body
      %s21 = ssub.s32 %s16, 1
      %s22 = ssub.s32 %s16, 2
      %s23 = sadd.s32 %s16, 1
      %s24 = ssub.s32 %s16, %s23
      %p25 = scmp.eq.s32.totalorder %s24, 0
      %s27 = sadd.s32 %s26, 1
      %s28 = scalar_select %p25, %s26, %s27
      %p31 = pneg %p25
      %p32 = scmp.eq.s32.totalorder %s16, 1
      %p33 = por %p31, %p32
      %p34 = scmp.ne.s32.totalorder %s26, %s29
      %p35 = scmp.eq.s32.totalorder %s16, 0
      %p36 = por %p34, %p35
      %p37 = scmp.ne.s32.totalorder %s26, %s29
      %p38 = scmp.eq.s32.totalorder %s21, 1
      %p39 = por %p37, %p38
      %p40 = scmp.ne.s32.totalorder %s29, %s30
      %p41 = scmp.eq.s32.totalorder %s21, 0
      %p42 = por %p40, %p41
      %p43 = scmp.ne.s32.totalorder %s29, %s30
      %p44 = scmp.eq.s32.totalorder %s22, 1
      %p45 = por %p43, %p44
      %p47 = scmp.ne.s32.totalorder %s30, %s46
      %p48 = scmp.eq.s32.totalorder %s22, 0
      %p49 = por %p47, %p48
      %s51 = sadd.s32 %s50, 1
      %p54 = scmp.eq.s32.totalorder %s16, 1
      %p55 = scmp.ne.s32.totalorder %s50, %s52
      %p56 = scmp.eq.s32.totalorder %s16, 0
      %p57 = por %p55, %p56
      %p58 = scmp.ne.s32.totalorder %s50, %s52
      %p59 = scmp.eq.s32.totalorder %s21, 1
      %p60 = por %p58, %p59
      %p61 = scmp.ne.s32.totalorder %s52, %s53
      %p62 = scmp.eq.s32.totalorder %s21, 0
      %p63 = por %p61, %p62
      %p64 = scmp.ne.s32.totalorder %s52, %s53
      %p65 = scmp.eq.s32.totalorder %s22, 1
      %p66 = por %p64, %p65
      %p68 = scmp.ne.s32.totalorder %s53, %s67
      %p69 = scmp.eq.s32.totalorder %s22, 0
      %p70 = por %p68, %p69
      %s72 = sadd.s32 %s71, 1
      %p75 = scmp.eq.s32.totalorder %s16, 1
      %p76 = scmp.ne.s32.totalorder %s71, %s73
      %p77 = scmp.eq.s32.totalorder %s16, 0
      %p78 = por %p76, %p77
      %p79 = scmp.ne.s32.totalorder %s71, %s73
      %p80 = scmp.eq.s32.totalorder %s21, 1
      %p81 = por %p79, %p80
      %p82 = scmp.ne.s32.totalorder %s73, %s74
      %p83 = scmp.eq.s32.totalorder %s21, 0
      %p84 = por %p82, %p83
      %p85 = scmp.ne.s32.totalorder %s73, %s74
      %p86 = scmp.eq.s32.totalorder %s22, 1
      %p87 = por %p85, %p86
      %p89 = scmp.ne.s32.totalorder %s74, %s88
      %p90 = scmp.eq.s32.totalorder %s22, 0
      %p91 = por %p89, %p90
      %s93 = sadd.s32 %s92, 1
      %p96 = scmp.eq.s32.totalorder %s16, 1
      %p97 = scmp.ne.s32.totalorder %s92, %s94
      %p98 = scmp.eq.s32.totalorder %s16, 0
      %p99 = por %p97, %p98
      %p100 = scmp.ne.s32.totalorder %s92, %s94
      %p101 = scmp.eq.s32.totalorder %s21, 1
      %p102 = por %p100, %p101
      %p103 = scmp.ne.s32.totalorder %s94, %s95
      %p104 = scmp.eq.s32.totalorder %s21, 0
      %p105 = por %p103, %p104
      %p106 = scmp.ne.s32.totalorder %s94, %s95
      %p107 = scmp.eq.s32.totalorder %s22, 1
      %p108 = por %p106, %p107
      %p110 = scmp.ne.s32.totalorder %s95, %s109
      %p111 = scmp.eq.s32.totalorder %s22, 0
      %p112 = por %p110, %p111
      %s114 = sadd.s32 %s113, 1
      %p117 = scmp.eq.s32.totalorder %s16, 1
      %p118 = scmp.ne.s32.totalorder %s113, %s115
      %p119 = scmp.eq.s32.totalorder %s16, 0
      %p120 = por %p118, %p119
      %p121 = scmp.ne.s32.totalorder %s113, %s115
      %p122 = scmp.eq.s32.totalorder %s21, 1
      %p123 = por %p121, %p122
      %p124 = scmp.ne.s32.totalorder %s115, %s116
      %p125 = scmp.eq.s32.totalorder %s21, 0
      %p126 = por %p124, %p125
      %p127 = scmp.ne.s32.totalorder %s115, %s116
      %p128 = scmp.eq.s32.totalorder %s22, 1
      %p129 = por %p127, %p128
      %p131 = scmp.ne.s32.totalorder %s116, %s130
      %p132 = scmp.eq.s32.totalorder %s22, 0
      %p133 = por %p131, %p132
      %s135 = sadd.s32 %s134, 1
      %p138 = scmp.eq.s32.totalorder %s16, 1
      %p139 = scmp.ne.s32.totalorder %s134, %s136
      %p140 = scmp.eq.s32.totalorder %s16, 0
      %p141 = por %p139, %p140
      %p142 = scmp.ne.s32.totalorder %s134, %s136
      %p143 = scmp.eq.s32.totalorder %s21, 1
      %p144 = por %p142, %p143
      %p145 = scmp.ne.s32.totalorder %s136, %s137
      %p146 = scmp.eq.s32.totalorder %s21, 0
      %p147 = por %p145, %p146
      %p148 = scmp.ne.s32.totalorder %s136, %s137
      %p149 = scmp.eq.s32.totalorder %s22, 1
      %p150 = por %p148, %p149
      %p152 = scmp.ne.s32.totalorder %s137, %s151
      %p153 = scmp.eq.s32.totalorder %s22, 0
      %p154 = por %p152, %p153
      %s156 = sadd.s32 %s155, 1
      %p159 = scmp.eq.s32.totalorder %s16, 1
      %p160 = scmp.ne.s32.totalorder %s155, %s157
      %p161 = scmp.eq.s32.totalorder %s16, 0
      %p162 = por %p160, %p161
      %p163 = scmp.ne.s32.totalorder %s155, %s157
      %p164 = scmp.eq.s32.totalorder %s21, 1
      %p165 = por %p163, %p164
      %p166 = scmp.ne.s32.totalorder %s157, %s158
      %p167 = scmp.eq.s32.totalorder %s21, 0
      %p168 = por %p166, %p167
      %p169 = scmp.ne.s32.totalorder %s157, %s158
      %p170 = scmp.eq.s32.totalorder %s22, 1
      %p171 = por %p169, %p170
      %p173 = scmp.ne.s32.totalorder %s158, %s172
      %p174 = scmp.eq.s32.totalorder %s22, 0
      %p175 = por %p173, %p174
      %s176 = ssub.s32 %s16, %s23
      %p177 = scmp.eq.s32.totalorder %s176, 0
      %s179 = sadd.s32 %s178, 1
      %s180 = scalar_select %p177, %s178, %s179
      %p183 = pneg %p177
      %p184 = scmp.eq.s32.totalorder %s16, 1
      %p185 = por %p183, %p184
      %p186 = scmp.ne.s32.totalorder %s178, %s181
      %p187 = scmp.eq.s32.totalorder %s16, 0
      %p188 = por %p186, %p187
      %p189 = scmp.ne.s32.totalorder %s178, %s181
      %p190 = scmp.eq.s32.totalorder %s21, 1
      %p191 = por %p189, %p190
      %p192 = scmp.ne.s32.totalorder %s181, %s182
      %p193 = scmp.eq.s32.totalorder %s21, 0
      %p194 = por %p192, %p193
      %p195 = scmp.ne.s32.totalorder %s181, %s182
      %p196 = scmp.eq.s32.totalorder %s22, 1
      %p197 = por %p195, %p196
      %p199 = scmp.ne.s32.totalorder %s182, %s198
      %p200 = scmp.eq.s32.totalorder %s22, 0
      %p201 = por %p199, %p200
      %p202 = scmp.le.s32.totalorder 1, %s16
      %p203 = scmp.lt.s32.totalorder %s16, 3
      %p204 = pnand %p202, %p203
      %p205 = pneg %p204
      // Predicated region
      $region9: #{tpu_custom_call.1} parent=5 // pred_check
        _
      $region10: #{tpu_custom_call.1} parent=5 // pred_check_branch
        %207 = sbr.rel (%p204) target = $region12
      $region11: #{tpu_custom_call.1} parent=5 // pred_region
        %s208 = ssub.s32 %s16, 1
        // Predicated region
        $region13: #{tpu_custom_call.1} parent=11 // pred_check
          %p209 = pneg %p63
        $region14: #{tpu_custom_call.1} parent=11 // pred_check_branch
          %211 = sbr.rel (%p209) target = $region16
        $region15: #{tpu_custom_call.1} parent=11 // pred_region
          _
        $region16: #{tpu_custom_call.1} parent=11 // pred_fallthru
          _
        // Predicated region
        $region17: #{tpu_custom_call.1} parent=11 // pred_check
          %p212 = pneg %p84
        $region18: #{tpu_custom_call.1} parent=11 // pred_check_branch
          %214 = sbr.rel (%p212) target = $region20
        $region19: #{tpu_custom_call.1} parent=11 // pred_region
          _
        $region20: #{tpu_custom_call.1} parent=11 // pred_fallthru
          _
        // Predicated region
        $region21: #{tpu_custom_call.1} parent=11 // pred_check
          %p215 = pneg %p105
        $region22: #{tpu_custom_call.1} parent=11 // pred_check_branch
          %217 = sbr.rel (%p215) target = $region24
        $region23: #{tpu_custom_call.1} parent=11 // pred_region
          _
        $region24: #{tpu_custom_call.1} parent=11 // pred_fallthru
          _
        // Predicated region
        $region25: #{tpu_custom_call.1} parent=11 // pred_check
          %p218 = pneg %p126
        $region26: #{tpu_custom_call.1} parent=11 // pred_check_branch
          %220 = sbr.rel (%p218) target = $region28
        $region27: #{tpu_custom_call.1} parent=11 // pred_region
          _
        $region28: #{tpu_custom_call.1} parent=11 // pred_fallthru
          _
        // Predicated region
        $region29: #{tpu_custom_call.1} parent=11 // pred_check
          %p221 = pneg %p147
        $region30: #{tpu_custom_call.1} parent=11 // pred_check_branch
          %223 = sbr.rel (%p221) target = $region32
        $region31: #{tpu_custom_call.1} parent=11 // pred_region
          _
        $region32: #{tpu_custom_call.1} parent=11 // pred_fallthru
          _
        // Predicated region
        $region33: #{tpu_custom_call.1} parent=11 // pred_check
          %p224 = pneg %p168
        $region34: #{tpu_custom_call.1} parent=11 // pred_check_branch
          %226 = sbr.rel (%p224) target = $region36
        $region35: #{tpu_custom_call.1} parent=11 // pred_region
          _
        $region36: #{tpu_custom_call.1} parent=11 // pred_fallthru
          _
      $region12: #{tpu_custom_call.1} parent=5 // pred_fallthru
        _
      %p227 = scmp.lt.s32.totalorder %s16, 2
      // Predicated region
      $region37: #{tpu_custom_call.1} parent=5 // pred_check
        %p228 = pneg %p227
      $region38: #{tpu_custom_call.1} parent=5 // pred_check_branch
        %230 = sbr.rel (%p228) target = $region40
      $region39: #{tpu_custom_call.1} parent=5 // pred_region
        // Predicated region
        $region41: #{tpu_custom_call.1} parent=39 // pred_check
          %p231 = pneg %p36
        $region42: #{tpu_custom_call.1} parent=39 // pred_check_branch
          %233 = sbr.rel (%p231) target = $region44
        $region43: #{tpu_custom_call.1} parent=39 // pred_region
          %p234 = scmp.lt.s32.totalorder %s16, 1
          %s235 = scalar_select %p234, %s16, 1
          %s236 = smul.addr %s235, 4
          %s237 = scalar_lea.vmem %s0, %s236
        $region44: #{tpu_custom_call.1} parent=39 // pred_fallthru
          _
      $region40: #{tpu_custom_call.1} parent=5 // pred_fallthru
        _
      %p238 = scmp.le.s32.totalorder 1, %s16
      %p239 = scmp.lt.s32.totalorder %s16, 3
      %p240 = pnand %p238, %p239
      %p241 = pneg %p240
      // Predicated region
      $region45: #{tpu_custom_call.1} parent=5 // pred_check
        _
      $region46: #{tpu_custom_call.1} parent=5 // pred_check_branch
        %243 = sbr.rel (%p240) target = $region48
      $region47: #{tpu_custom_call.1} parent=5 // pred_region
        %s244 = ssub.s32 %s16, 1
        %p245 = scmp.lt.s32.totalorder %s21, 1
        %s246 = scalar_select %p245, %s21, 1
        %s247 = smul.addr %s246, 4
        %s248 = scalar_lea.vmem %s0, %s247
        %p249 = pneg %p42
        %p250 = pneg %p39
        %p251 = pneg %p63
        %p252 = pneg %p60
        %p253 = pneg %p84
        %p254 = pneg %p81
        %p255 = pneg %p105
        %p256 = pneg %p102
        %p257 = pneg %p126
        %p258 = pneg %p123
        %p259 = pneg %p147
        %p260 = pneg %p144
        %p261 = pneg %p168
        %p262 = pneg %p165
        %p263 = pneg %p194
        %p264 = pneg %p191
        %s265 = sand.u32 %s181, 1
        %s266 = scalar_lea.sflag [#allocation3], %s265
        %s267 = sand.u32 %s181, 1
        %s268 = smul.addr %s267, 8
        %s269 = scalar_lea.vmem [#allocation2], %s268
        %p270 = scmp.lt.s32.totalorder %s21, 1
        %s271 = scalar_select %p270, %s21, 1
        %s272 = smul.addr %s271, 4
        %s273 = scalar_lea.vmem %s0, %s272
        %v275 = vld [vmem:[%s273] sm:$0xf]
        %v276 = vld [vmem:[%s1] sm:$0xf]
        %v277 = vld [vmem:[%s1 + $0x4] sm:$0xf]
        %v278 = vld [vmem:[%s1 + $0x8] sm:$0xf]
        %v279 = vld [vmem:[%s1 + $0xc] sm:$0xf]
        %v280 = vld [vmem:[%s2] sm:$0x1]
        %v282 = vlaneseq
        %v283 = vshrl.u32 %v282, 7
        %v284 = vsub.s32 0, %v283
        %v285 = vrot.slane %v280, %v284
        %v291 = vunpack.c.l.b16 %v276
        %v292 = vunpack.c.l.b16 %v277
        %v293 = vunpack.c.l.b16 %v278
        %v294 = vunpack.c.l.b16 %v279
        %v295 = vpack.c.b16 %v292, %v291
        %v296 = vpack.c.b16 %v294, %v293
        %vm299 = vcmask 261120
        %v301 = vsel %vm299, %v275, 0
        %303 = vmatprep.subr.bf16.mxu0 0
        %304 = vmatpush1.bf16.msra.mxu0 0
        %305 = vmatprep.subr.bf16.mxu0 0
        %306 = vmatpush1.bf16.msra.mxu0 0
        %307 = vmatprep.subr.bf16.mxu0 0
        %308 = vmatpush1.bf16.msra.mxu0 0
        %309 = vmatprep.subr.bf16.mxu0 0
        %310 = vmatpush1.bf16.msra.mxu0 0
        %311 = vmatprep.subr.bf16.mxu0 0
        %312 = vmatpush1.bf16.msra.mxu0 0
        %313 = vmatprep.subr.bf16.mxu0 0
        %314 = vmatpush1.bf16.msra.mxu0 0
        %315 = vmatprep.subr.bf16.mxu0 0
        %316 = vmatpush1.bf16.msra.mxu0 %v296
        %317 = vmatprep.subr.bf16.mxu0 0
        %318 = vmatpush1.bf16.msra.mxu0 %v295
        %319 = vmatprep.subr.bf16.mxu0 0
        %320 = vmatpush2.bf16.msra.mxu0 0
        %321 = vmatprep.subr.bf16.mxu0 0
        %322 = vmatpush2.bf16.msra.mxu0 0
        %323 = vmatprep.subr.bf16.mxu0 0
        %324 = vmatpush2.bf16.msra.mxu0 0
        %325 = vmatprep.subr.bf16.mxu0 0
        %326 = vmatpush2.bf16.msra.mxu0 0
        %327 = vmatprep.subr.bf16.mxu0 0
        %328 = vmatpush2.bf16.msra.mxu0 0
        %329 = vmatprep.subr.bf16.mxu0 0
        %330 = vmatpush2.bf16.msra.mxu0 0
        %331 = vmatprep.subr.bf16.mxu0 0
        %332 = vmatpush2.bf16.msra.mxu0 0
        %333 = vmatprep.subr.bf16.mxu0 0
        %334 = vmatpush2.bf16.msra.mxu0 0
        %335 = vmatprep.mubr.bf16.mxu0 0
        %336 = vmatmul.mubr.bf16.gmra.mxu0 %v301
        %v337 = vpop.f32.mrf.mxu0
        %v338 = vadd.f32 %v285, %v337
        %v339 = vpop.f32.mrf.mxu0
        %v340 = vpop.f32.mrf.mxu0
        %v341 = vpop.f32.mrf.mxu0
        %342 = vdwg.mxu0
        %v343 = vld [vmem:[%s3] sm:$0xf]
        %v344 = vld [vmem:[%s3 + $0x4] sm:$0xf]
        %v345 = vld [vmem:[%s3 + $0x8] sm:$0xf]
        %v346 = vld [vmem:[%s3 + $0xc] sm:$0xf]
        %v347 = vld [vmem:[%s4] sm:$0x1]
        %v349 = vlaneseq
        %v350 = vshrl.u32 %v349, 7
        %v351 = vsub.s32 0, %v350
        %v352 = vrot.slane %v347, %v351
        %v358 = vunpack.c.l.b16 %v343
        %v359 = vunpack.c.l.b16 %v344
        %v360 = vunpack.c.l.b16 %v345
        %v361 = vunpack.c.l.b16 %v346
        %v362 = vpack.c.b16 %v359, %v358
        %v363 = vpack.c.b16 %v361, %v360
        %366 = vmatprep.subr.bf16.mxu0 0
        %367 = vmatpush1.bf16.msra.mxu0 0
        %368 = vmatprep.subr.bf16.mxu0 0
        %369 = vmatpush1.bf16.msra.mxu0 0
        %370 = vmatprep.subr.bf16.mxu0 0
        %371 = vmatpush1.bf16.msra.mxu0 0
        %372 = vmatprep.subr.bf16.mxu0 0
        %373 = vmatpush1.bf16.msra.mxu0 0
        %374 = vmatprep.subr.bf16.mxu0 0
        %375 = vmatpush1.bf16.msra.mxu0 0
        %376 = vmatprep.subr.bf16.mxu0 0
        %377 = vmatpush1.bf16.msra.mxu0 0
        %378 = vmatprep.subr.bf16.mxu0 0
        %379 = vmatpush1.bf16.msra.mxu0 %v363
        %380 = vmatprep.subr.bf16.mxu0 0
        %381 = vmatpush1.bf16.msra.mxu0 %v362
        %382 = vmatprep.subr.bf16.mxu0 0
        %383 = vmatpush2.bf16.msra.mxu0 0
        %384 = vmatprep.subr.bf16.mxu0 0
        %385 = vmatpush2.bf16.msra.mxu0 0
        %386 = vmatprep.subr.bf16.mxu0 0
        %387 = vmatpush2.bf16.msra.mxu0 0
        %388 = vmatprep.subr.bf16.mxu0 0
        %389 = vmatpush2.bf16.msra.mxu0 0
        %390 = vmatprep.subr.bf16.mxu0 0
        %391 = vmatpush2.bf16.msra.mxu0 0
        %392 = vmatprep.subr.bf16.mxu0 0
        %393 = vmatpush2.bf16.msra.mxu0 0
        %394 = vmatprep.subr.bf16.mxu0 0
        %395 = vmatpush2.bf16.msra.mxu0 0
        %396 = vmatprep.subr.bf16.mxu0 0
        %397 = vmatpush2.bf16.msra.mxu0 0
        %398 = vmatprep.mubr.bf16.mxu0 0
        %399 = vmatmul.mubr.bf16.gmra.mxu0 %v301
        %v400 = vpop.f32.mrf.mxu0
        %v401 = vadd.f32 %v352, %v400
        %v402 = vpop.f32.mrf.mxu0
        %v403 = vpop.f32.mrf.mxu0
        %v404 = vpop.f32.mrf.mxu0
        %405 = vdwg.mxu0
        %v406 = vld [vmem:[%s5] sm:$0xf]
        %v407 = vld [vmem:[%s5 + $0x4] sm:$0xf]
        %v408 = vld [vmem:[%s5 + $0x8] sm:$0xf]
        %v409 = vld [vmem:[%s5 + $0xc] sm:$0xf]
        %v410 = vld [vmem:[%s6] sm:$0x1]
        %v412 = vlaneseq
        %v413 = vshrl.u32 %v412, 7
        %v414 = vsub.s32 0, %v413
        %v415 = vrot.slane %v410, %v414
        %v421 = vunpack.c.l.b16 %v406
        %v422 = vunpack.c.l.b16 %v407
        %v423 = vunpack.c.l.b16 %v408
        %v424 = vunpack.c.l.b16 %v409
        %v425 = vpack.c.b16 %v422, %v421
        %v426 = vpack.c.b16 %v424, %v423
        %429 = vmatprep.subr.bf16.mxu0 0
        %430 = vmatpush1.bf16.msra.mxu0 0
        %431 = vmatprep.subr.bf16.mxu0 0
        %432 = vmatpush1.bf16.msra.mxu0 0
        %433 = vmatprep.subr.bf16.mxu0 0
        %434 = vmatpush1.bf16.msra.mxu0 0
        %435 = vmatprep.subr.bf16.mxu0 0
        %436 = vmatpush1.bf16.msra.mxu0 0
        %437 = vmatprep.subr.bf16.mxu0 0
        %438 = vmatpush1.bf16.msra.mxu0 0
        %439 = vmatprep.subr.bf16.mxu0 0
        %440 = vmatpush1.bf16.msra.mxu0 0
        %441 = vmatprep.subr.bf16.mxu0 0
        %442 = vmatpush1.bf16.msra.mxu0 %v426
        %443 = vmatprep.subr.bf16.mxu0 0
        %444 = vmatpush1.bf16.msra.mxu0 %v425
        %445 = vmatprep.subr.bf16.mxu0 0
        %446 = vmatpush2.bf16.msra.mxu0 0
        %447 = vmatprep.subr.bf16.mxu0 0
        %448 = vmatpush2.bf16.msra.mxu0 0
        %449 = vmatprep.subr.bf16.mxu0 0
        %450 = vmatpush2.bf16.msra.mxu0 0
        %451 = vmatprep.subr.bf16.mxu0 0
        %452 = vmatpush2.bf16.msra.mxu0 0
        %453 = vmatprep.subr.bf16.mxu0 0
        %454 = vmatpush2.bf16.msra.mxu0 0
        %455 = vmatprep.subr.bf16.mxu0 0
        %456 = vmatpush2.bf16.msra.mxu0 0
        %457 = vmatprep.subr.bf16.mxu0 0
        %458 = vmatpush2.bf16.msra.mxu0 0
        %459 = vmatprep.subr.bf16.mxu0 0
        %460 = vmatpush2.bf16.msra.mxu0 0
        %461 = vmatprep.mubr.bf16.mxu0 0
        %462 = vmatmul.mubr.bf16.gmra.mxu0 %v301
        %v463 = vpop.f32.mrf.mxu0
        %v464 = vadd.f32 %v415, %v463
        %v465 = vpop.f32.mrf.mxu0
        %v466 = vpop.f32.mrf.mxu0
        %v467 = vpop.f32.mrf.mxu0
        %468 = vdwg.mxu0
        %vm469 = vcmask 130048
        %v471 = vsel %vm469, %v338, 0
        %v474 = vsel %vm469, %v401, 0
        %476 = vmatprep.subr.mxu0 0.0
        %477 = vmatpush1.xpose.msra.mxu0 0.0
        %478 = vmatprep.subr.mxu0 0.0
        %479 = vmatpush1.xpose.msra.mxu0 0.0
        %480 = vmatprep.subr.mxu0 0.0
        %481 = vmatpush1.xpose.msra.mxu0 0.0
        %482 = vmatprep.subr.mxu0 0.0
        %483 = vmatpush1.xpose.msra.mxu0 0.0
        %484 = vmatprep.subr.mxu0 0.0
        %485 = vmatpush1.xpose.msra.mxu0 0.0
        %486 = vmatprep.subr.mxu0 0.0
        %487 = vmatpush1.xpose.msra.mxu0 0.0
        %488 = vmatprep.subr.mxu0 0.0
        %489 = vmatpush1.xpose.msra.mxu0 0.0
        %490 = vmatprep.subr.mxu0 0.0
        %491 = vmatpush1.xpose.msra.mxu0 0.0
        %492 = vmatprep.subr.mxu0 0.0
        %493 = vmatpush1.xpose.msra.mxu0 0.0
        %494 = vmatprep.subr.mxu0 0.0
        %495 = vmatpush1.xpose.msra.mxu0 0.0
        %496 = vmatprep.subr.mxu0 0.0
        %497 = vmatpush1.xpose.msra.mxu0 0.0
        %498 = vmatprep.subr.mxu0 0.0
        %499 = vmatpush1.xpose.msra.mxu0 0.0
        %500 = vmatprep.subr.mxu0 0.0
        %501 = vmatpush1.xpose.msra.mxu0 0.0
        %502 = vmatprep.subr.mxu0 0.0
        %503 = vmatpush1.xpose.msra.mxu0 0.0
        %504 = vmatprep.subr.mxu0 0.0
        %505 = vmatpush1.xpose.msra.mxu0 0.0
        %506 = vmatprep.subr.mxu0 0.0
        %507 = vmatpush1.xpose.msra.mxu0 %v474
        %508 = vmatprep.subr.mxu0 0.0
        %509 = vmatpush2.xpose.msra.mxu0 0.0
        %510 = vmatprep.subr.mxu0 0.0
        %511 = vmatpush2.xpose.msra.mxu0 0.0
        %512 = vmatprep.subr.mxu0 0.0
        %513 = vmatpush2.xpose.msra.mxu0 0.0
        %514 = vmatprep.subr.mxu0 0.0
        %515 = vmatpush2.xpose.msra.mxu0 0.0
        %516 = vmatprep.subr.mxu0 0.0
        %517 = vmatpush2.xpose.msra.mxu0 0.0
        %518 = vmatprep.subr.mxu0 0.0
        %519 = vmatpush2.xpose.msra.mxu0 0.0
        %520 = vmatprep.subr.mxu0 0.0
        %521 = vmatpush2.xpose.msra.mxu0 0.0
        %522 = vmatprep.subr.mxu0 0.0
        %523 = vmatpush2.xpose.msra.mxu0 0.0
        %524 = vmatprep.subr.mxu0 0.0
        %525 = vmatpush2.xpose.msra.mxu0 0.0
        %526 = vmatprep.subr.mxu0 0.0
        %527 = vmatpush2.xpose.msra.mxu0 0.0
        %528 = vmatprep.subr.mxu0 0.0
        %529 = vmatpush2.xpose.msra.mxu0 0.0
        %530 = vmatprep.subr.mxu0 0.0
        %531 = vmatpush2.xpose.msra.mxu0 0.0
        %532 = vmatprep.subr.mxu0 0.0
        %533 = vmatpush2.xpose.msra.mxu0 0.0
        %534 = vmatprep.subr.mxu0 0.0
        %535 = vmatpush2.xpose.msra.mxu0 0.0
        %536 = vmatprep.subr.mxu0 0.0
        %537 = vmatpush2.xpose.msra.mxu0 0.0
        %538 = vmatprep.subr.mxu0 0.0
        %539 = vmatpush2.xpose.msra.mxu0 0.0
        %540 = vmatprep.mubr.f32.mxu0 0.0
        %541 = vmatmul.mubr.f32.gmra.mxu0 %v471
        %v542 = vpop.f32.mrf.mxu0
        %v543 = vadd.f32 0.0, %v542
        %v544 = vpop.f32.mrf.mxu0
        %545 = vdwg.mxu0
        %v546 = vrcp.pop 4.0
        %v547 = vmul.f32 %v543, %v546
        %v548 = vfloor.f32 %v547
        %vm549 = vcmask 64512
        %v550 = vsel %vm549, %v548, -inf
        %551 = vmax.xlane.f32.xlu0 %v550
        %v552 = vpop.xlane.xlu0 %551
        %v553 = vsub.f32 %v548, %v552
        %v554 = vmul.f32 %v553, 1.442695
        %v555 = vpow.pop %v554
        %v556 = vsel %vm549, %v555, 0.0
        %557 = vadd.xlane.f32.xlu0 %v556
        %v558 = vpop.xlane.xlu0 %557
        %v559 = vrcp.pop %v558
        %v560 = vmul.f32 %v555, %v559
        %v562 = vsel %vm549, %v560, 0
        %564 = vmatprep.subr.mxu0 0.0
        %565 = vmatpush1.msra.mxu0 0.0
        %566 = vmatprep.subr.mxu0 0.0
        %567 = vmatpush1.msra.mxu0 0.0
        %568 = vmatprep.subr.mxu0 0.0
        %569 = vmatpush1.msra.mxu0 0.0
        %570 = vmatprep.subr.mxu0 0.0
        %571 = vmatpush1.msra.mxu0 0.0
        %572 = vmatprep.subr.mxu0 0.0
        %573 = vmatpush1.msra.mxu0 0.0
        %574 = vmatprep.subr.mxu0 0.0
        %575 = vmatpush1.msra.mxu0 0.0
        %576 = vmatprep.subr.mxu0 0.0
        %577 = vmatpush1.msra.mxu0 0.0
        %578 = vmatprep.subr.mxu0 0.0
        %579 = vmatpush1.msra.mxu0 0.0
        %580 = vmatprep.subr.mxu0 0.0
        %581 = vmatpush1.msra.mxu0 0.0
        %582 = vmatprep.subr.mxu0 0.0
        %583 = vmatpush1.msra.mxu0 0.0
        %584 = vmatprep.subr.mxu0 0.0
        %585 = vmatpush1.msra.mxu0 0.0
        %586 = vmatprep.subr.mxu0 0.0
        %587 = vmatpush1.msra.mxu0 0.0
        %588 = vmatprep.subr.mxu0 0.0
        %589 = vmatpush1.msra.mxu0 0.0
        %590 = vmatprep.subr.mxu0 0.0
        %591 = vmatpush1.msra.mxu0 0.0
        %592 = vmatprep.subr.mxu0 0.0
        %593 = vmatpush1.msra.mxu0 0.0
        %594 = vmatprep.subr.mxu0 0.0
        %595 = vmatpush1.msra.mxu0 %v464
        %596 = vmatprep.subr.mxu0 0.0
        %597 = vmatpush2.msra.mxu0 0.0
        %598 = vmatprep.subr.mxu0 0.0
        %599 = vmatpush2.msra.mxu0 0.0
        %600 = vmatprep.subr.mxu0 0.0
        %601 = vmatpush2.msra.mxu0 0.0
        %602 = vmatprep.subr.mxu0 0.0
        %603 = vmatpush2.msra.mxu0 0.0
        %604 = vmatprep.subr.mxu0 0.0
        %605 = vmatpush2.msra.mxu0 0.0
        %606 = vmatprep.subr.mxu0 0.0
        %607 = vmatpush2.msra.mxu0 0.0
        %608 = vmatprep.subr.mxu0 0.0
        %609 = vmatpush2.msra.mxu0 0.0
        %610 = vmatprep.subr.mxu0 0.0
        %611 = vmatpush2.msra.mxu0 0.0
        %612 = vmatprep.subr.mxu0 0.0
        %613 = vmatpush2.msra.mxu0 0.0
        %614 = vmatprep.subr.mxu0 0.0
        %615 = vmatpush2.msra.mxu0 0.0
        %616 = vmatprep.subr.mxu0 0.0
        %617 = vmatpush2.msra.mxu0 0.0
        %618 = vmatprep.subr.mxu0 0.0
        %619 = vmatpush2.msra.mxu0 0.0
        %620 = vmatprep.subr.mxu0 0.0
        %621 = vmatpush2.msra.mxu0 0.0
        %622 = vmatprep.subr.mxu0 0.0
        %623 = vmatpush2.msra.mxu0 0.0
        %624 = vmatprep.subr.mxu0 0.0
        %625 = vmatpush2.msra.mxu0 0.0
        %626 = vmatprep.subr.mxu0 0.0
        %627 = vmatpush2.msra.mxu0 0.0
        %628 = vmatprep.mubr.f32.mxu0 0.0
        %629 = vmatmul.mubr.f32.gmra.mxu0 %v562
        %v630 = vpop.f32.mrf.mxu0
        %v631 = vadd.f32 0.0, %v630
        %v632 = vpop.f32.mrf.mxu0
        %633 = vdwg.mxu0
        %634 = vst.msk [vmem:[%s269] sm:$0xff] %vm469, %v631
        %s635 = sand.u32 %s181, 1
        %s636 = scalar_lea.sflag [#allocation3], %s635
        %s637 = sand.u32 %s181, 1
        %s638 = smul.addr %s637, 8
        %s639 = scalar_lea.vmem [#allocation2], %s638
        // Predicated region
        $region49: #{tpu_custom_call.1} parent=47 // pred_check
          %p640 = pneg %p191
        $region50: #{tpu_custom_call.1} parent=47 // pred_check_branch
          %642 = sbr.rel (%p640) target = $region52
        $region51: #{tpu_custom_call.1} parent=47 // pred_region
          %s644 = ssub.s32 128, 128
          %645 = vsyncadd %s636, %s644
          %s646 = smul.addr %s21, 128
          %s647 = scalar_lea.hbm %s7, %s646
          %s649 = sshll.u32 %s639, 4
          %s650 = int_to_ptr.vmem [resolvable:$true] %s649
          %652 = dma.vmem_to_hbm [thread:$0]  %s650, 128, %s647, %s636
        $region52: #{tpu_custom_call.1} parent=47 // pred_fallthru
          _
      $region48: #{tpu_custom_call.1} parent=5 // pred_fallthru
        _
      %p653 = scmp.le.s32.totalorder 2, %s16
      // Predicated region
      $region53: #{tpu_custom_call.1} parent=5 // pred_check
        %p654 = pneg %p653
      $region54: #{tpu_custom_call.1} parent=5 // pred_check_branch
        %656 = sbr.rel (%p654) target = $region56
      $region55: #{tpu_custom_call.1} parent=5 // pred_region
        %s657 = ssub.s32 %s16, 2
        // Predicated region
        $region57: #{tpu_custom_call.1} parent=55 // pred_check
          %p658 = pneg %p197
        $region58: #{tpu_custom_call.1} parent=55 // pred_check_branch
          %660 = sbr.rel (%p658) target = $region60
        $region59: #{tpu_custom_call.1} parent=55 // pred_region
          %s661 = sand.u32 %s182, 1
          %s662 = scalar_lea.sflag [#allocation3], %s661
          %s663 = sand.u32 %s182, 1
          %s664 = smul.addr %s663, 8
          %s665 = scalar_lea.vmem [#allocation2], %s664
          %666 = dma.done %s662, 128
        $region60: #{tpu_custom_call.1} parent=55 // pred_fallthru
          _
      $region56: #{tpu_custom_call.1} parent=5 // pred_fallthru
        _
    $region6: #{tpu_custom_call.1} parent=1 // loop_footer
      %s20 = sadd.s32 1, %s16
    $region7: #{tpu_custom_call.1} parent=1 // loop_footer_branch
      %15 = sbr.rel target = $region3
    $region8: #{tpu_custom_call.1} parent=1 // loop_exit
      _
    %667 = vsyncpa [#allocation3], 1
    %s668 = scalar_lea.sflag [#allocation3], 1
    %669 = vsyncpa %s668, 1

</llo_original>
